<compile_context>
chip_gen: v6e
topology: v6e:2x2x1
jax: 0.10.0
libtpu: 0.0.40
codegen_flags: <defaults>
</compile_context>

<pallas_src>
import itertools
from functools import partial

import numpy as np
import jax
import jax.numpy as jnp
from jax import lax
from jax.experimental import pallas as pl
from jax.experimental.pallas import tpu as pltpu


IN_W = 128     # lane-dense input slab width: [c | delta | p_list | u | zeros]
PACK_W = 128   # lane-dense output slab width stored by the kernel (unmasked vst)
OUT_W = 16     # lanes shipped device -> host (9 used, padded to 16)

# Packed-output lane layout (within the first OUT_W lanes).
_LANE_P_LEFT = 0
_LANE_LEFT = 1
_LANE_RIGHT = 2
_LANE_PL_LEFT = 3
_LANE_PL_RIGHT = 4
_LANE_NEW_LEFT_C = 5
_LANE_NEW_LEFT_D = 6
_LANE_NEW_RIGHT_C = 7
_LANE_NEW_RIGHT_D = 8


def _ifelse_branch_kernel(idx_ref, test_ref, slab_ref, out_ref, *, D):
    """One grid step: [bb, 128] input slab -> [bb, 128] packed output slab.

    Input slab lanes: 0..D-1 = c, D..2D-1 = delta, 2D = p_list, 2D+1 = u.
    """
    t_idx = idx_ref[0]          # runtime SMEM scalar: one compile serves all nodes
    test = test_ref[0]

    slab = slab_ref[...]        # [bb, IN_W] — one dense load

    # target = x.select_from_index(1, target_idx): dynamic column extraction via
    # iota mask + cross-lane sum (goes to the otherwise-idle XLU).
    col = lax.broadcasted_iota(jnp.int32, slab.shape, 1)
    tc = jnp.sum(jnp.where(col == t_idx, slab, 0.0), axis=1, keepdims=True)      # target.c
    td = jnp.sum(jnp.where(col == t_idx + D, slab, 0.0), axis=1, keepdims=True)  # target.delta
    plist = slab[:, 2 * D:2 * D + 1]                                             # [bb, 1]
    u = slab[:, 2 * D + 1:2 * D + 2]                                             # [bb, 1] ~ U[0,1)

    lo = tc - td                # target.getLeft()
    hi = tc + td                # target.getRight()

    # --- extract_branch_probability (constants.score_f != 'hybrid' path) ---
    # TODO(synk): constants.score_f == 'hybrid' scoring variant not implemented.
    left_index = hi <= test
    right_index = lo > test
    denom = hi - lo
    safe_denom = jnp.where(denom == 0.0, 1.0, denom)
    cross_p = (test - lo) / safe_denom
    p_left = jnp.where(left_index, 1.0, jnp.where(right_index, 0.0, cross_p))
    p_right = 1.0 - p_left

    # --- sample_from_p: Bernoulli(p_left) from a precomputed uniform ---
    res = (u < p_left).astype(jnp.float32)
    left_m = res
    right_m = 1.0 - res

    # --- calculate_branch: clipped target-column values for each branch ---
    tmin = jnp.minimum(hi, test)
    tmax = jnp.maximum(lo, test)
    new_left_c = (lo + tmin) * 0.5
    new_left_d = (tmin - lo) * 0.5
    new_right_c = (tmax + hi) * 0.5
    new_right_d = (hi - tmax) * 0.5

    # log(p) clamped so the never-taken branch lane stays finite (reference only
    # evaluates log(p) for selected rows; consumed values are unchanged).
    tiny = jnp.float32(1e-38)
    pl_left = plist + jnp.log(jnp.maximum(p_left, tiny))
    pl_right = plist + jnp.log(jnp.maximum(p_right, tiny))

    # Zero-init the full lane-dense tile (unmasked writeback via BlockSpec),
    # then 9 static single-lane column stores — no full-width select chain.
    out_ref[...] = jnp.zeros_like(out_ref)
    out_ref[:, _LANE_P_LEFT:_LANE_P_LEFT + 1] = p_left
    out_ref[:, _LANE_LEFT:_LANE_LEFT + 1] = left_m
    out_ref[:, _LANE_RIGHT:_LANE_RIGHT + 1] = right_m
    out_ref[:, _LANE_PL_LEFT:_LANE_PL_LEFT + 1] = pl_left
    out_ref[:, _LANE_PL_RIGHT:_LANE_PL_RIGHT + 1] = pl_right
    out_ref[:, _LANE_NEW_LEFT_C:_LANE_NEW_LEFT_C + 1] = new_left_c
    out_ref[:, _LANE_NEW_LEFT_D:_LANE_NEW_LEFT_D + 1] = new_left_d
    out_ref[:, _LANE_NEW_RIGHT_C:_LANE_NEW_RIGHT_C + 1] = new_right_c
    out_ref[:, _LANE_NEW_RIGHT_D:_LANE_NEW_RIGHT_D + 1] = new_right_d


@partial(jax.jit, static_argnames=("block_b",))
def _ifelse_branch_device(c, delta, p_list, key, idx_arr, test_arr, *, block_b):
    """Jitted device path. Inputs are already padded to Bp rows (numpy, outside
    jit) so the cache key is (Bp, D, block_b), not the raw batch size."""
    Bp, D = c.shape
    if 2 * D + 2 > IN_W:
        raise ValueError(f"D={D} too large for the {IN_W}-lane input slab")

    # Bernoulli uniforms generated on-device (one lane of randomness per row).
    u = jax.random.uniform(key, (Bp, 1), dtype=jnp.float32)

    # One lane-dense input slab: [c | delta | p_list | u | zero-pad] -> [Bp, 128].
    slab = jnp.concatenate([c, delta, p_list, u], axis=1)
    slab = jnp.pad(slab, ((0, 0), (0, IN_W - slab.shape[1])))

    smem = pl.BlockSpec(memory_space=pltpu.MemorySpace.SMEM)
    out = pl.pallas_call(
        partial(_ifelse_branch_kernel, D=D),
        out_shape=jax.ShapeDtypeStruct((Bp, PACK_W), jnp.float32),
        grid=(Bp // block_b,),
        in_specs=[
            smem,                                               # target_idx (scalar)
            smem,                                               # test (scalar)
            pl.BlockSpec((block_b, IN_W), lambda i: (i, 0)),    # fused input slab
        ],
        out_specs=pl.BlockSpec((block_b, PACK_W), lambda i: (i, 0)),
        compiler_params=pltpu.CompilerParams(
            dimension_semantics=("parallel",)),
    )(idx_arr, test_arr, slab)

    # Only 9 lanes are consumed host-side: shrink the D2H copy on device while
    # keeping the in-kernel store full-width / unmasked.
    return out[:, :OUT_W]


def _pick_bucket(B):
    """Power-of-2 batch bucket (min 8) and block size. Bucketing keeps the jit
    cache small; block_b <= 512 gives >=2 grid steps once Bp >= 1024 so both
    v7x TensorCores get work, while v5e/v6e just see one big block."""
    Bp = max(8, 1 << (max(B, 1) - 1).bit_length())
    block_b = min(Bp, 512)
    return Bp, block_b


def _ifelse_branch(c_np, delta_np, plist_np, key, target_idx, test):
    """Un-jitted shim: numpy padding to the bucket, one jitted device call,
    one narrow D2H copy."""
    B, _ = c_np.shape
    Bp, block_b = _pick_bucket(B)
    pad = Bp - B
    if pad:
        c_np = np.pad(c_np, ((0, pad), (0, 0)))
        delta_np = np.pad(delta_np, ((0, pad), (0, 0)))
        plist_np = np.pad(plist_np, ((0, pad), (0, 0)))
    idx_arr = jnp.array([target_idx], dtype=jnp.int32)
    test_arr = jnp.array([test], dtype=jnp.float32)
    out = _ifelse_branch_device(jnp.asarray(c_np), jnp.asarray(delta_np),
                                jnp.asarray(plist_np), key, idx_arr, test_arr,
                                block_b=block_b)
    return np.asarray(out)[:B]      # np.asarray syncs; single D2H copy per node


def concatenate_states(a, b):
    if not a:
        return b
    if not b:
        return a
    out = {}
    for k in a:
        va, vb = a[k], b[k]
        if isinstance(va, list):
            out[k] = va + vb
        else:
            out[k] = np.concatenate([np.asarray(va), np.asarray(vb)], axis=0)
    return out


_NODE_COUNTER = itertools.count()


class IfElseKernel:
    """JAX/Pallas counterpart of gpu_DSE.modules.IfElse (hot path in-kernel)."""

    def __init__(self, target_idx, test, body, orelse, f_test=None):
        self.target_idx = int(target_idx)
        self.test = float(test)
        self.f_test = f_test
        self.body = body        # arbitrary sub-module: host-side glue
        self.orelse = orelse    # arbitrary sub-module: host-side glue
        self._node_id = next(_NODE_COUNTER)
        self._calls = 0

    def __call__(self, states, seed=0):
        c = np.asarray(states['c'], dtype=np.float32)
        delta = np.asarray(states['delta'], dtype=np.float32)
        idx = np.asarray(states['idx_list'])
        B, D = c.shape
        if B == 0:
            return {}
        p_list = np.asarray(states['p_list'], dtype=np.float32).reshape(B, 1)

        # Per-node / per-invocation PRNG stream (fixed seed would repeat draws).
        key = jax.random.fold_in(jax.random.PRNGKey(seed), self._node_id)
        key = jax.random.fold_in(key, self._calls)
        self._calls += 1

        # TODO(synk): batching several IfElse nodes (per-row target/test via
        # scalar prefetch) into one pallas_call + one D2H is not implemented;
        # each node still pays one dispatch + one host sync.
        packed = _ifelse_branch(c, delta, p_list, key, self.target_idx, self.test)

        left = packed[:, _LANE_LEFT] > 0.0
        right = packed[:, _LANE_RIGHT] > 0.0
        t = self.target_idx

        # TODO(synk): data-dependent batch partition (ragged shapes) and python
        # trajectory lists have no Pallas equivalent; selection is host-side.
        body_states, orelse_states = {}, {}
        if left.any():
            li = np.nonzero(left)[0]
            c_l = c[left]
            d_l = delta[left]
            c_l[:, t] = packed[left, _LANE_NEW_LEFT_C]     # splice target column only
            d_l[:, t] = packed[left, _LANE_NEW_LEFT_D]
            body_states = {'c': c_l, 'delta': d_l,
                           'p_list': packed[left, _LANE_PL_LEFT].reshape(-1, 1),
                           'idx_list': idx[left]}
            if 'trajectories_l' in states:
                body_states['trajectories_l'] = [states['trajectories_l'][i] for i in li]
                body_states['trajectories_r'] = [states['trajectories_r'][i] for i in li]
        if right.any():
            ri = np.nonzero(right)[0]
            c_r = c[right]
            d_r = delta[right]
            c_r[:, t] = packed[right, _LANE_NEW_RIGHT_C]
            d_r[:, t] = packed[right, _LANE_NEW_RIGHT_D]
            orelse_states = {'c': c_r, 'delta': d_r,
                             'p_list': packed[right, _LANE_PL_RIGHT].reshape(-1, 1),
                             'idx_list': idx[right]}
            if 'trajectories_l' in states:
                orelse_states['trajectories_l'] = [states['trajectories_l'][i] for i in ri]
                orelse_states['trajectories_r'] = [states['trajectories_r'][i] for i in ri]

        if body_states:
            body_states = self.body(body_states)
        if orelse_states:
            orelse_states = self.orelse(orelse_states)
        return concatenate_states(body_states, orelse_states)


if __name__ == "__main__":
    key = jax.random.PRNGKey(0)
    B, D = 8, 4
    k1, k2, k3 = jax.random.split(key, 3)
    c = jax.random.normal(k1, (B, D), dtype=jnp.float32)
    delta = jnp.abs(jax.random.normal(k2, (B, D), dtype=jnp.float32)) * 0.5
    p_list = jnp.zeros((B, 1), dtype=jnp.float32)

    c_np = np.asarray(c)
    d_np = np.asarray(delta)
    p_np = np.asarray(p_list)

    # --- end-to-end module path (host partition + identity sub-modules) ---
    states = {'c': c_np, 'delta': d_np, 'p_list': p_np, 'idx_list': np.arange(B)}
    identity = lambda s: s   # synthetic body / orelse sub-modules
    mod = IfElseKernel(target_idx=1, test=0.0, body=identity, orelse=identity)
    res = mod(states, seed=0)

    # --- direct device call: run the kernel once and block on the result ---
    target_idx, test = 1, 0.0
    Bp, block_b = _pick_bucket(B)
    pad = Bp - B
    cp = np.pad(c_np, ((0, pad), (0, 0)))
    dp = np.pad(d_np, ((0, pad), (0, 0)))
    pp = np.pad(p_np, ((0, pad), (0, 0)))
    packed_dev = _ifelse_branch_device(
        jnp.asarray(cp), jnp.asarray(dp), jnp.asarray(pp), k3,
        jnp.array([target_idx], jnp.int32), jnp.array([test], jnp.float32),
        block_b=block_b)
    jax.block_until_ready(packed_dev)
    packed = np.asarray(packed_dev)[:B]

    # --- numpy reference check of the in-kernel math ---
    tc = cp[:B, target_idx:target_idx + 1]
    td = dp[:B, target_idx:target_idx + 1]
    lo, hi = tc - td, tc + td
    denom = np.where((hi - lo) == 0.0, 1.0, hi - lo)
    p_left_ref = np.where(hi <= test, 1.0,
                          np.where(lo > test, 0.0, (test - lo) / denom)).astype(np.float32)
    tmin, tmax = np.minimum(hi, test), np.maximum(lo, test)
    assert np.allclose(packed[:, _LANE_P_LEFT:_LANE_P_LEFT + 1], p_left_ref, atol=1e-6)
    assert np.allclose(packed[:, _LANE_NEW_LEFT_C:_LANE_NEW_LEFT_C + 1], (lo + tmin) / 2, atol=1e-6)
    assert np.allclose(packed[:, _LANE_NEW_LEFT_D:_LANE_NEW_LEFT_D + 1], (tmin - lo) / 2, atol=1e-6)
    assert np.allclose(packed[:, _LANE_NEW_RIGHT_C:_LANE_NEW_RIGHT_C + 1], (tmax + hi) / 2, atol=1e-6)
    assert np.allclose(packed[:, _LANE_NEW_RIGHT_D:_LANE_NEW_RIGHT_D + 1], (hi - tmax) / 2, atol=1e-6)
    # each row lands in exactly one branch
    assert np.allclose(packed[:, _LANE_LEFT] + packed[:, _LANE_RIGHT], 1.0)

    # --- module-level sanity: every input element landed in exactly one branch ---
    assert res['c'].shape == (B, D)
    assert res['delta'].shape == (B, D)
    assert res['p_list'].shape == (B, 1)
    assert sorted(np.asarray(res['idx_list']).tolist()) == list(range(B))
    assert np.all(np.isfinite(res['p_list']))

    print("KERNEL_OK")
</pallas_src>

<mosaic_0001>
module attributes {stable_mosaic.version = 11 : i64} {
  func.func @_ifelse_branch_kernel(%arg0: i32, %arg1: memref<1xi32, #tpu.memory_space<smem>>, %arg2: memref<1xf32, #tpu.memory_space<smem>>, %arg3: memref<8x128xf32, #tpu.memory_space<vmem>>, %arg4: memref<8x128xf32, #tpu.memory_space<vmem>>) attributes {dimension_semantics = [#tpu.dimension_semantics<parallel>], iteration_bounds = array<i64: 1>, scalar_prefetch = 0 : i64, scratch_operands = 0 : i64, tpu.core_type = #tpu.core_type<tc>, window_params = [{transform_indices = @transform_0, window_bounds = array<i64: 1>}, {transform_indices = @transform_1, window_bounds = array<i64: 1>}, {transform_indices = @transform_2, window_bounds = array<i64: 8, 128>}, {transform_indices = @transform_3, window_bounds = array<i64: 8, 128>}]} {
    %c0 = arith.constant 0 : index
    %0 = memref.load %arg1[%c0] : memref<1xi32, #tpu.memory_space<smem>>
    %c0_0 = arith.constant 0 : index
    %1 = memref.load %arg2[%c0_0] : memref<1xf32, #tpu.memory_space<smem>>
    %c0_1 = arith.constant 0 : index
    %c0_2 = arith.constant 0 : index
    %2 = vector.load %arg3[%c0_1, %c0_2] : memref<8x128xf32, #tpu.memory_space<vmem>>, vector<8x128xf32>
    %3 = tpu.iota {dimensions = array<i32: 1>} : vector<8x128xi32>
    %4 = vector.broadcast %0 : i32 to vector<8x128xi32>
    %5 = arith.cmpi eq, %3, %4 : vector<8x128xi32>
    %cst = arith.constant 0.000000e+00 : f32
    %6 = vector.broadcast %cst : f32 to vector<8x128xf32>
    %7 = arith.select %5, %2, %6 : vector<8x128xi1>, vector<8x128xf32>
    %cst_3 = arith.constant dense<0.000000e+00> : vector<8xf32>
    %8 = vector.multi_reduction <add>, %7, %cst_3 [1] : vector<8x128xf32> to vector<8xf32>
    %9 = vector.shape_cast %8 : vector<8xf32> to vector<8x1xf32>
    %c4_i32 = arith.constant 4 : i32
    %10 = arith.addi %0, %c4_i32 : i32
    %11 = vector.broadcast %10 : i32 to vector<8x128xi32>
    %12 = arith.cmpi eq, %3, %11 : vector<8x128xi32>
    %cst_4 = arith.constant 0.000000e+00 : f32
    %13 = vector.broadcast %cst_4 : f32 to vector<8x128xf32>
    %14 = arith.select %12, %2, %13 : vector<8x128xi1>, vector<8x128xf32>
    %cst_5 = arith.constant dense<0.000000e+00> : vector<8xf32>
    %15 = vector.multi_reduction <add>, %14, %cst_5 [1] : vector<8x128xf32> to vector<8xf32>
    %16 = vector.shape_cast %15 : vector<8xf32> to vector<8x1xf32>
    %17 = vector.extract_strided_slice %2 {offsets = [0, 8], sizes = [8, 1], strides = [1, 1]} : vector<8x128xf32> to vector<8x1xf32>
    %18 = vector.extract_strided_slice %2 {offsets = [0, 9], sizes = [8, 1], strides = [1, 1]} : vector<8x128xf32> to vector<8x1xf32>
    %19 = arith.subf %9, %16 : vector<8x1xf32>
    %20 = arith.addf %9, %16 : vector<8x1xf32>
    %21 = vector.broadcast %1 : f32 to vector<8x1xf32>
    %22 = arith.cmpf ole, %20, %21 : vector<8x1xf32>
    %23 = vector.broadcast %1 : f32 to vector<8x1xf32>
    %24 = arith.cmpf ogt, %19, %23 : vector<8x1xf32>
    %25 = arith.subf %20, %19 : vector<8x1xf32>
    %cst_6 = arith.constant 0.000000e+00 : f32
    %26 = vector.broadcast %cst_6 : f32 to vector<8x1xf32>
    %27 = arith.cmpf oeq, %25, %26 : vector<8x1xf32>
    %cst_7 = arith.constant 1.000000e+00 : f32
    %28 = vector.broadcast %cst_7 : f32 to vector<8x1xf32>
    %29 = arith.select %27, %28, %25 : vector<8x1xi1>, vector<8x1xf32>
    %30 = vector.broadcast %1 : f32 to vector<8x1xf32>
    %31 = arith.subf %30, %19 : vector<8x1xf32>
    %32 = arith.divf %31, %29 : vector<8x1xf32>
    %cst_8 = arith.constant 0.000000e+00 : f32
    %33 = vector.broadcast %cst_8 : f32 to vector<8x1xf32>
    %34 = arith.select %24, %33, %32 : vector<8x1xi1>, vector<8x1xf32>
    %cst_9 = arith.constant 1.000000e+00 : f32
    %35 = vector.broadcast %cst_9 : f32 to vector<8x1xf32>
    %36 = arith.select %22, %35, %34 : vector<8x1xi1>, vector<8x1xf32>
    %cst_10 = arith.constant 1.000000e+00 : f32
    %37 = vector.broadcast %cst_10 : f32 to vector<8x1xf32>
    %38 = arith.subf %37, %36 : vector<8x1xf32>
    %39 = arith.cmpf olt, %18, %36 : vector<8x1xf32>
    %40 = arith.extui %39 : vector<8x1xi1> to vector<8x1xi32>
    %41 = arith.sitofp %40 : vector<8x1xi32> to vector<8x1xf32>
    %cst_11 = arith.constant 1.000000e+00 : f32
    %42 = vector.broadcast %cst_11 : f32 to vector<8x1xf32>
    %43 = arith.subf %42, %41 : vector<8x1xf32>
    %44 = vector.broadcast %1 : f32 to vector<8x1xf32>
    %45 = arith.minimumf %20, %44 : vector<8x1xf32>
    %46 = vector.broadcast %1 : f32 to vector<8x1xf32>
    %47 = arith.maximumf %19, %46 : vector<8x1xf32>
    %48 = arith.addf %19, %45 : vector<8x1xf32>
    %cst_12 = arith.constant 5.000000e-01 : f32
    %49 = vector.broadcast %cst_12 : f32 to vector<8x1xf32>
    %50 = arith.mulf %48, %49 : vector<8x1xf32>
    %51 = arith.subf %45, %19 : vector<8x1xf32>
    %cst_13 = arith.constant 5.000000e-01 : f32
    %52 = vector.broadcast %cst_13 : f32 to vector<8x1xf32>
    %53 = arith.mulf %51, %52 : vector<8x1xf32>
    %54 = arith.addf %47, %20 : vector<8x1xf32>
    %cst_14 = arith.constant 5.000000e-01 : f32
    %55 = vector.broadcast %cst_14 : f32 to vector<8x1xf32>
    %56 = arith.mulf %54, %55 : vector<8x1xf32>
    %57 = arith.subf %20, %47 : vector<8x1xf32>
    %cst_15 = arith.constant 5.000000e-01 : f32
    %58 = vector.broadcast %cst_15 : f32 to vector<8x1xf32>
    %59 = arith.mulf %57, %58 : vector<8x1xf32>
    %cst_16 = arith.constant 9.99999935E-39 : f32
    %60 = vector.broadcast %cst_16 : f32 to vector<8x1xf32>
    %61 = arith.maximumf %36, %60 : vector<8x1xf32>
    %62 = math.log %61 : vector<8x1xf32>
    %63 = arith.addf %17, %62 : vector<8x1xf32>
    %cst_17 = arith.constant 9.99999935E-39 : f32
    %64 = vector.broadcast %cst_17 : f32 to vector<8x1xf32>
    %65 = arith.maximumf %38, %64 : vector<8x1xf32>
    %66 = math.log %65 : vector<8x1xf32>
    %67 = arith.addf %17, %66 : vector<8x1xf32>
    %cst_18 = arith.constant 0.000000e+00 : f32
    %68 = vector.broadcast %cst_18 : f32 to vector<8x128xf32>
    %c0_19 = arith.constant 0 : index
    %c0_20 = arith.constant 0 : index
    %69 = vector.load %arg4[%c0_19, %c0_20] : memref<8x128xf32, #tpu.memory_space<vmem>>, vector<8x128xf32>
    tpu.vector_store %arg4[%c0_19, %c0_20], %68 {strides = array<i32>} : memref<8x128xf32, #tpu.memory_space<vmem>>, vector<8x128xf32>,
    %c0_21 = arith.constant 0 : index
    %c0_22 = arith.constant 0 : index
    %70 = vector.load %arg4[%c0_21, %c0_22] : memref<8x128xf32, #tpu.memory_space<vmem>>, vector<8x1xf32>
    tpu.vector_store %arg4[%c0_21, %c0_22], %36 {strides = array<i32>} : memref<8x128xf32, #tpu.memory_space<vmem>>, vector<8x1xf32>,
    %c0_23 = arith.constant 0 : index
    %c1 = arith.constant 1 : index
    %71 = vector.load %arg4[%c0_23, %c1] : memref<8x128xf32, #tpu.memory_space<vmem>>, vector<8x1xf32>
    tpu.vector_store %arg4[%c0_23, %c1], %41 {strides = array<i32>} : memref<8x128xf32, #tpu.memory_space<vmem>>, vector<8x1xf32>,
    %c0_24 = arith.constant 0 : index
    %c2 = arith.constant 2 : index
    %72 = vector.load %arg4[%c0_24, %c2] : memref<8x128xf32, #tpu.memory_space<vmem>>, vector<8x1xf32>
    tpu.vector_store %arg4[%c0_24, %c2], %43 {strides = array<i32>} : memref<8x128xf32, #tpu.memory_space<vmem>>, vector<8x1xf32>,
    %c0_25 = arith.constant 0 : index
    %c3 = arith.constant 3 : index
    %73 = vector.load %arg4[%c0_25, %c3] : memref<8x128xf32, #tpu.memory_space<vmem>>, vector<8x1xf32>
    tpu.vector_store %arg4[%c0_25, %c3], %63 {strides = array<i32>} : memref<8x128xf32, #tpu.memory_space<vmem>>, vector<8x1xf32>,
    %c0_26 = arith.constant 0 : index
    %c4 = arith.constant 4 : index
    %74 = vector.load %arg4[%c0_26, %c4] : memref<8x128xf32, #tpu.memory_space<vmem>>, vector<8x1xf32>
    tpu.vector_store %arg4[%c0_26, %c4], %67 {strides = array<i32>} : memref<8x128xf32, #tpu.memory_space<vmem>>, vector<8x1xf32>,
    %c0_27 = arith.constant 0 : index
    %c5 = arith.constant 5 : index
    %75 = vector.load %arg4[%c0_27, %c5] : memref<8x128xf32, #tpu.memory_space<vmem>>, vector<8x1xf32>
    tpu.vector_store %arg4[%c0_27, %c5], %50 {strides = array<i32>} : memref<8x128xf32, #tpu.memory_space<vmem>>, vector<8x1xf32>,
    %c0_28 = arith.constant 0 : index
    %c6 = arith.constant 6 : index
    %76 = vector.load %arg4[%c0_28, %c6] : memref<8x128xf32, #tpu.memory_space<vmem>>, vector<8x1xf32>
    tpu.vector_store %arg4[%c0_28, %c6], %53 {strides = array<i32>} : memref<8x128xf32, #tpu.memory_space<vmem>>, vector<8x1xf32>,
    %c0_29 = arith.constant 0 : index
    %c7 = arith.constant 7 : index
    %77 = vector.load %arg4[%c0_29, %c7] : memref<8x128xf32, #tpu.memory_space<vmem>>, vector<8x1xf32>
    tpu.vector_store %arg4[%c0_29, %c7], %56 {strides = array<i32>} : memref<8x128xf32, #tpu.memory_space<vmem>>, vector<8x1xf32>,
    %c0_30 = arith.constant 0 : index
    %c8 = arith.constant 8 : index
    %78 = vector.load %arg4[%c0_30, %c8] : memref<8x128xf32, #tpu.memory_space<vmem>>, vector<8x1xf32>
    tpu.vector_store %arg4[%c0_30, %c8], %59 {strides = array<i32>} : memref<8x128xf32, #tpu.memory_space<vmem>>, vector<8x1xf32>,
    return
  }
  func.func @transform_0(%arg0: i32) -> i32 {
    %c0_i32 = arith.constant 0 : i32
    %c0_i32_0 = arith.constant 0 : i32
    return %c0_i32 : i32
  }
  func.func @transform_1(%arg0: i32) -> i32 {
    %c0_i32 = arith.constant 0 : i32
    %c0_i32_0 = arith.constant 0 : i32
    return %c0_i32 : i32
  }
  func.func @transform_2(%arg0: i32) -> (i32, i32) {
    %c0_i32 = arith.constant 0 : i32
    %c0_i32_0 = arith.constant 0 : i32
    return %arg0, %c0_i32 : i32, i32
  }
  func.func @transform_3(%arg0: i32) -> (i32, i32) {
    %c0_i32 = arith.constant 0 : i32
    %c0_i32_0 = arith.constant 0 : i32
    return %arg0, %c0_i32 : i32, i32
  }
}

</mosaic_0001>

<llo_original>
// kernel: _ifelse_branch_device.1
$region0: #{_ifelse_branch_device.1}
  #allocation0 [shape = 'u32[]', space=smem, size = 0x4, offset = 0x4, fixed_abs, tag = 'smem constant byte address 0x4 - core index']
  #allocation1 [shape = 'u32[144,128]{1,0:T(1,128)}', space=vmem, size = 0x12000, scoped, tag = 'internal scratch']
  #allocation2 [shape = 's32[1]{0:T(128)S(6)}', space=smem, size = 0x200, scoped, tag = 'scoped memory for _ifelse_branch_device.1']
  #allocation3 [shape = 'f32[1]{0:T(128)S(6)}', space=smem, size = 0x200, scoped, tag = 'scoped memory for _ifelse_branch_device.1']
  %s0 = inlined_call_operand.<no memory space> [shape: s32[1], index: 0, kind: input, shape index: {}]
  %s1 = inlined_call_operand.<no memory space> [shape: f32[1], index: 1, kind: input, shape index: {}]
  %s2 = inlined_call_operand.vmem [shape: f32[8,128], index: 2, kind: input, shape index: {}]
  %s3 = inlined_call_operand.hbm [shape: f32[8,128], index: 3, kind: output, shape index: {}]
  %s4 = sld [smem:[#allocation0]]
  $region22: #{_ifelse_branch_device.1} parent=0
    _
  %s6 = ssub.s32 1, %s4
  %s7 = scalar_select 0, %s6, %s4
  %8 = sst [smem:[#allocation2]] %s0
  %9 = sst [smem:[#allocation3]] %s1
  $region1: #{_ifelse_branch_device.1} parent=0
    #allocation4 [shape = 'u8[4096]{0}', space=vmem, size = 0x1000, scoped, tag = 'output window, operand 0, single buffered']
    #allocation5 [shape = 's32[1]{0}', space=sflag, size = 0x4, scoped, tag = 'scoped memory for _ifelse_branch_device.1']
    %10 = vsyncpa [#allocation5], 0
    // Predicated region
    $region2: #{_ifelse_branch_device.1} parent=1 // pred_check
      _
    $region3: #{_ifelse_branch_device.1} parent=1 // pred_check_branch
      %12 = sbr.rel (0) target = $region5
    $region4: #{_ifelse_branch_device.1} parent=1 // pred_region
      _
    $region5: #{_ifelse_branch_device.1} parent=1 // pred_fallthru
      _
    // Predicated region
    $region6: #{_ifelse_branch_device.1} parent=1 // pred_check
      _
    $region7: #{_ifelse_branch_device.1} parent=1 // pred_check_branch
      %14 = sbr.rel (0) target = $region9
    $region8: #{_ifelse_branch_device.1} parent=1 // pred_region
      _
    $region9: #{_ifelse_branch_device.1} parent=1 // pred_fallthru
      _
    // Predicated region
    $region10: #{_ifelse_branch_device.1} parent=1 // pred_check
      _
    $region11: #{_ifelse_branch_device.1} parent=1 // pred_check_branch
      %16 = sbr.rel (0) target = $region13
    $region12: #{_ifelse_branch_device.1} parent=1 // pred_region
      _
    $region13: #{_ifelse_branch_device.1} parent=1 // pred_fallthru
      _
    %s17 = sld [smem:[#allocation2]]
    %s18 = sld [smem:[#allocation3]]
    %v19 = vld [vmem:[%s2] sm:$0xff]
    %v20 = vlaneseq
    %v21 = vand.u32 %v20, 127
    %v22 = vstv %s17
    %vm23 = vcmp.eq.s32.totalorder %v21, %v22
    %v24 = vsel %vm23, %v19, 0.0
    %25 = vadd.xlane.f32.xlu0 %v24
    %v26 = vpop.xlane.xlu0 %25
    %s27 = sadd.s32 %s17, 4
    %v28 = vstv %s27
    %vm29 = vcmp.eq.s32.totalorder %v21, %v28
    %v30 = vsel %vm29, %v19, 0.0
    %31 = vadd.xlane.f32.xlu0 %v30
    %v32 = vpop.xlane.xlu0 %31
    %v33 = vsub.f32 %v26, %v32
    %v34 = vadd.f32 %v26, %v32
    %v35 = vstv %s18
    %vm36 = vcmp.le.f32.partialorder %v34, %v35
    %vm37 = vcmp.gt.f32.partialorder %v33, %v35
    %v38 = vsub.f32 %v34, %v33
    %vm39 = vcmp.eq.f32.partialorder %v38, 0.0
    %v40 = vsel %vm39, 1.0, %v38
    %v41 = vsub.f32 %v35, %v33
    %v42 = vrcp.pop %v40
    %v43 = vmul.f32 %v41, %v42
    %v44 = vsel %vm37, 0.0, %v43
    %v45 = vsel %vm36, 1.0, %v44
    %v46 = vsub.f32 1.0, %v45
    %vm47 = vcmp.lt.f32.partialorder %v19, %v45
    %v48 = vsel %vm47, 1, 0
    %v49 = vcvt.s32.f32 %v48
    %v50 = vsub.f32 1.0, %v49
    %v51 = vmin.f32 %v34, %v35
    %v52 = vmax.f32 %v33, %v35
    %v53 = vadd.f32 %v33, %v51
    %v54 = vmul.f32 %v53, 0.5
    %v55 = vsub.f32 %v51, %v33
    %v56 = vmul.f32 %v55, 0.5
    %v57 = vadd.f32 %v52, %v34
    %v58 = vmul.f32 %v57, 0.5
    %v59 = vsub.f32 %v34, %v52
    %v60 = vmul.f32 %v59, 0.5
    %v61 = vmax.f32 %v45, 1e-38
    %v62 = vlog2.pop %v61
    %v63 = vmul.f32 %v62, 0.6931472
    %v64 = vadd.f32 %v19, %v63
    %v65 = vmax.f32 %v46, 1e-38
    %v66 = vlog2.pop %v65
    %v67 = vmul.f32 %v66, 0.6931472
    %v68 = vadd.f32 %v19, %v67
    %69 = vst [vmem:[#allocation4] sm:$0xff] 0.0
    %vm70 = vcmask 7168
    %71 = vst.msk [vmem:[#allocation4] sm:$0xff] %vm70, %v45
    %73 = vrot.lane.b32.xlu0 %v49, 120
    %v74 = vpop.permute.xlu0 %73
    %vm76 = vcmask 15368
    %77 = vst.msk [vmem:[#allocation4] sm:$0xff] %vm76, %v74
    %79 = vrot.lane.b32.xlu0 %v50, 121
    %v80 = vpop.permute.xlu0 %79
    %vm82 = vcmask 23568
    %83 = vst.msk [vmem:[#allocation4] sm:$0xff] %vm82, %v80
    %85 = vrot.lane.b32.xlu0 %v64, 123
    %v86 = vpop.permute.xlu0 %85
    %vm88 = vcmask 31768
    %89 = vst.msk [vmem:[#allocation4] sm:$0xff] %vm88, %v86
    %91 = vrot.lane.b32.xlu0 %v68, 124
    %v92 = vpop.permute.xlu0 %91
    %vm94 = vcmask 39968
    %95 = vst.msk [vmem:[#allocation4] sm:$0xff] %vm94, %v92
    %vm96 = vcmask 48168
    %97 = vst.msk [vmem:[#allocation4] sm:$0xff] %vm96, %v54
    %vm98 = vcmask 56368
    %99 = vst.msk [vmem:[#allocation4] sm:$0xff] %vm98, %v56
    %vm100 = vcmask 64568
    %101 = vst.msk [vmem:[#allocation4] sm:$0xff] %vm100, %v58
    %vm102 = vcmask 72768
    %103 = vst.msk [vmem:[#allocation4] sm:$0xff] %vm102, %v60
    // Predicated region
    $region14: #{_ifelse_branch_device.1} parent=1 // pred_check
      _
    $region15: #{_ifelse_branch_device.1} parent=1 // pred_check_branch
      %105 = sbr.rel (0) target = $region17
    $region16: #{_ifelse_branch_device.1} parent=1 // pred_region
      %s107 = ssub.s32 128, 128
      %108 = vsyncadd [#allocation5], %s107
      %s110 = sshll.u32 [#allocation4], 4
      %s111 = int_to_ptr.vmem [resolvable:$true] %s110
      %113 = dma.vmem_to_hbm [thread:$0]  %s111, 128, %s3, [#allocation5]
    $region17: #{_ifelse_branch_device.1} parent=1 // pred_fallthru
      _
    // Predicated region
    $region18: #{_ifelse_branch_device.1} parent=1 // pred_check
      _
    $region19: #{_ifelse_branch_device.1} parent=1 // pred_check_branch
      %115 = sbr.rel (0) target = $region21
    $region20: #{_ifelse_branch_device.1} parent=1 // pred_region
      %116 = dma.done [#allocation5], 128
    $region21: #{_ifelse_branch_device.1} parent=1 // pred_fallthru
      _
    %117 = vsyncpa [#allocation5], 1

</llo_original>
